<compile_context>
chip_gen: v7x
topology: tpu7x:2x2x1
jax: 0.10.0
libtpu: 0.0.40
codegen_flags: <defaults>
</compile_context>

<pallas_src>
import functools
import math

import jax
import jax.numpy as jnp
from jax.experimental import pallas as pl
from jax.experimental.pallas import tpu as pltpu

EMBED_DIM = 32
NUM_HEADS = 4
TANH_CLIP = 10.0


# ----------------------------- Pallas kernels -------------------------------


def _node_proj_kernel(emb_ref, wn_ref, cache_ref):
    """(TR, D) @ (D, 3D) -> fused cache rows: glimpse_key | glimpse_val | logit_key."""
    cache_ref[...] = jnp.dot(emb_ref[...], wn_ref[...],
                             preferred_element_type=jnp.float32)


def _graph_ctx_kernel(emb_ref, wf_ref, gc_ref, *, n_real):
    """Graph context: mean over the real nodes (pad rows are zero) then project_fixed_context."""
    mean_emb = jnp.sum(emb_ref[...], axis=1) * (1.0 / float(n_real))      # (TB, D)
    gc_ref[...] = jnp.dot(mean_emb, wf_ref[...],
                          preferred_element_type=jnp.float32)


def _logp_kernel(cache_ref, emb_ref, gc_ref, idxf_ref, idxc_ref, mask_ref,
                 wc_ref, wo_ref, hsel_ref, hexp_ref, logp_ref):
    """Batched single decoding step: in-kernel context gather + masked MHA + pointer logits."""
    D = EMBED_DIM
    H = NUM_HEADS
    dh = D // H
    TB, Np, _ = emb_ref.shape
    neg_inf = -jnp.inf

    emb = emb_ref[...]                               # (TB, Np, D)
    cache = cache_ref[...]                           # (TB, Np, 3D) fused cache
    gk = cache[:, :, 0 * D:1 * D]                    # glimpse key
    gv = cache[:, :, 1 * D:2 * D]                    # glimpse val
    lk = cache[:, :, 2 * D:3 * D]                    # logit key
    mask = mask_ref[...]                             # (TB, Np), 1.0 == infeasible / padded

    # in-kernel gather of first / current node embeddings (one-hot, VPU + sublane reduce)
    node_ids = jax.lax.broadcasted_iota(jnp.int32, (TB, Np), 1)
    oh_f = (node_ids == idxf_ref[...]).astype(jnp.float32)                # (TB, Np)
    oh_c = (node_ids == idxc_ref[...]).astype(jnp.float32)
    first_emb = jnp.sum(oh_f[:, :, None] * emb, axis=1)                   # (TB, D)
    curr_emb = jnp.sum(oh_c[:, :, None] * emb, axis=1)                    # (TB, D)

    # step-context projection (concat avoided by splitting W_context rows) + graph context
    q = (jnp.dot(first_emb, wc_ref[0:D, :], preferred_element_type=jnp.float32)
         + jnp.dot(curr_emb, wc_ref[D:2 * D, :], preferred_element_type=jnp.float32)
         + gc_ref[...])                                                   # (TB, D)

    # multi-head attention without a per-head loop: 0/1 head-selector matmuls
    prod = q[:, None, :] * gk                                             # (TB, Np, D)
    scores = jnp.dot(prod.reshape(TB * Np, D), hsel_ref[...],
                     preferred_element_type=jnp.float32)                  # (TB*Np, H)
    scores = scores.reshape(TB, Np, H) * (1.0 / math.sqrt(dh))
    scores = jnp.where(mask[:, :, None] > 0.5, neg_inf, scores)           # mask_inner
    m = jnp.max(scores, axis=1, keepdims=True)                            # (TB, 1, H)
    p = jnp.exp(scores - m)
    denom = jnp.sum(p, axis=1, keepdims=True)                             # (TB, 1, H)
    r = pl.reciprocal(denom, approx=True)
    r = r * (2.0 - denom * r)            # one Newton step -> ~f32 accurate, EUP still used
    attn = p * r                                                          # (TB, Np, H)
    attn_full = jnp.dot(attn.reshape(TB * Np, H), hexp_ref[...],
                        preferred_element_type=jnp.float32).reshape(TB, Np, D)
    glimpse = jnp.sum(attn_full * gv, axis=1)                             # (TB, D)
    glimpse = jnp.dot(glimpse, wo_ref[...],
                      preferred_element_type=jnp.float32)                 # project_out

    # pointer logits over (padded) nodes, tanh clipping, mask, log_softmax
    logits = jnp.sum(glimpse[:, None, :] * lk, axis=2) * (1.0 / math.sqrt(D))   # (TB, Np)
    logits = jnp.tanh(logits) * TANH_CLIP
    logits = jnp.where(mask > 0.5, neg_inf, logits)
    lmax = jnp.max(logits, axis=1, keepdims=True)
    lse = jnp.log(jnp.sum(jnp.exp(logits - lmax), axis=1, keepdims=True)) + lmax
    logp_ref[...] = logits - lse                                          # lane-dense store


# ------------------------------ wrappers -------------------------------------


def _round_up(x, m):
    return ((x + m - 1) // m) * m


def _pick_batch_tile(b):
    # batch tile: multiple of 8 sublanes when possible; otherwise one block over the batch.
    for tb in (64, 32, 16, 8):
        if b % tb == 0:
            return tb
    return b


def _pick_row_tile(rows):
    # row tile for the flattened node projection (rows is a multiple of 128 after N-padding).
    for tr in (512, 256, 128):
        if rows % tr == 0:
            return tr
    return rows


def precompute_cache(emb_pad, w_node, w_fixed, *, n_real):
    """emb_pad: (B, N_pad, D) zero-padded embeddings -> (cache (B, N_pad, 3D), graph_ctx (B, D))."""
    B, Np, D = emb_pad.shape
    rows = B * Np
    TR = _pick_row_tile(rows)

    cache_flat = pl.pallas_call(
        _node_proj_kernel,
        out_shape=jax.ShapeDtypeStruct((rows, 3 * D), jnp.float32),
        grid=(rows // TR,),
        in_specs=[
            pl.BlockSpec((TR, D), lambda i: (i, 0)),          # flattened embeddings
            pl.BlockSpec((D, 3 * D), lambda i: (0, 0)),       # W_node (constant across grid)
        ],
        out_specs=pl.BlockSpec((TR, 3 * D), lambda i: (i, 0)),
        compiler_params=pltpu.CompilerParams(dimension_semantics=("parallel",)),
    )(emb_pad.reshape(rows, D), w_node)
    cache = cache_flat.reshape(B, Np, 3 * D)

    TB = _pick_batch_tile(B)
    graph_ctx = pl.pallas_call(
        functools.partial(_graph_ctx_kernel, n_real=n_real),
        out_shape=jax.ShapeDtypeStruct((B, D), jnp.float32),
        grid=(B // TB,),
        in_specs=[
            pl.BlockSpec((TB, Np, D), lambda i: (i, 0, 0)),   # embeddings
            pl.BlockSpec((D, D), lambda i: (0, 0)),           # W_fixed
        ],
        out_specs=pl.BlockSpec((TB, D), lambda i: (i, 0)),
        compiler_params=pltpu.CompilerParams(dimension_semantics=("parallel",)),
    )(emb_pad, w_fixed)
    return cache, graph_ctx


def get_log_p(cache, graph_ctx, emb_pad, first_node, current_node, mask_f,
              w_context, w_out):
    """One _get_log_p decoding step. Returns lane-padded log_p of shape (B, N_pad)."""
    B, Np, D3 = cache.shape
    D = D3 // 3
    H = NUM_HEADS
    TB = _pick_batch_tile(B)

    # static 0/1 head-selector (D, H) and its expander (H, D)
    head_of_dim = jnp.arange(D, dtype=jnp.int32) // (D // H)
    hsel = (head_of_dim[:, None] == jnp.arange(H, dtype=jnp.int32)[None, :]).astype(jnp.float32)
    hexp = hsel.T

    idx_f = first_node.astype(jnp.int32).reshape(B, 1)
    idx_c = current_node.astype(jnp.int32).reshape(B, 1)

    return pl.pallas_call(
        _logp_kernel,
        out_shape=jax.ShapeDtypeStruct((B, Np), jnp.float32),
        grid=(B // TB,),
        in_specs=[
            pl.BlockSpec((TB, Np, 3 * D), lambda i: (i, 0, 0)),   # fused cache (gk|gv|lk)
            pl.BlockSpec((TB, Np, D), lambda i: (i, 0, 0)),       # node embeddings
            pl.BlockSpec((TB, D), lambda i: (i, 0)),              # graph context
            pl.BlockSpec((TB, 1), lambda i: (i, 0)),              # first node index
            pl.BlockSpec((TB, 1), lambda i: (i, 0)),              # current node index
            pl.BlockSpec((TB, Np), lambda i: (i, 0)),             # mask (1.0 = infeasible)
            pl.BlockSpec((2 * D, D), lambda i: (0, 0)),           # W_context
            pl.BlockSpec((D, D), lambda i: (0, 0)),               # W_out (project_out)
            pl.BlockSpec((D, H), lambda i: (0, 0)),               # head selector
            pl.BlockSpec((H, D), lambda i: (0, 0)),               # head expander
        ],
        out_specs=pl.BlockSpec((TB, Np), lambda i: (i, 0)),       # lane-dense log_p
        compiler_params=pltpu.CompilerParams(dimension_semantics=("parallel",)),
    )(cache, emb_pad, graph_ctx, idx_f, idx_c, mask_f, w_context, w_out, hsel, hexp)


# --------------------------- pure-JAX reference -------------------------------


def _reference(embeddings, ctx2d, action_mask, w_node, w_fixed, w_context, w_out):
    B, N, D = embeddings.shape
    H, dh = NUM_HEADS, EMBED_DIM // NUM_HEADS
    proj = embeddings @ w_node
    gk, gv, lk = proj[..., :D], proj[..., D:2 * D], proj[..., 2 * D:]
    gc = embeddings.mean(1) @ w_fixed
    q = ctx2d @ w_context + gc
    qh = q.reshape(B, H, dh)
    kh = gk.reshape(B, N, H, dh)
    vh = gv.reshape(B, N, H, dh)
    mask = ~action_mask
    scores = jnp.einsum("bhd,bnhd->bhn", qh, kh) / math.sqrt(dh)
    scores = jnp.where(mask[:, None, :], -jnp.inf, scores)
    attn = jax.nn.softmax(scores, axis=-1)
    glimpse = jnp.einsum("bhn,bnhd->bhd", attn, vh).reshape(B, D)
    go = glimpse @ w_out
    logits = jnp.einsum("bd,bnd->bn", go, lk) / math.sqrt(D)
    logits = jnp.tanh(logits) * TANH_CLIP
    logits = jnp.where(mask, -jnp.inf, logits)
    return jax.nn.log_softmax(logits, axis=-1)


# --------------------------------- main ---------------------------------------


if __name__ == "__main__":
    B, N, D = 2, 8, EMBED_DIM
    Np = _round_up(N, 128)                    # lane-dense node axis
    key = jax.random.PRNGKey(0)
    k1, k2, k3, k4, k5 = jax.random.split(key, 5)

    embeddings = jax.random.normal(k1, (B, N, D), dtype=jnp.float32)

    s = 1.0 / math.sqrt(D)
    w_node = jax.random.uniform(k2, (D, 3 * D), minval=-s, maxval=s, dtype=jnp.float32)
    w_fixed = jax.random.uniform(k3, (D, D), minval=-s, maxval=s, dtype=jnp.float32)
    s2 = 1.0 / math.sqrt(2 * D)
    w_context = jax.random.uniform(k4, (2 * D, D), minval=-s2, maxval=s2, dtype=jnp.float32)
    w_out = jax.random.uniform(k5, (D, D), minval=-s, maxval=s, dtype=jnp.float32)

    # environment state (TSP-like): first node = 0, current node per batch, visited nodes masked
    first_node = jnp.zeros((B,), dtype=jnp.int32)
    current_node = jnp.array([3, 5], dtype=jnp.int32)
    action_mask = jnp.ones((B, N), dtype=bool)
    action_mask = action_mask.at[jnp.arange(B), first_node].set(False)
    action_mask = action_mask.at[jnp.arange(B), current_node].set(False)

    # pad the node axis to a multiple of 128 lanes; padded nodes are marked infeasible
    emb_pad = jnp.pad(embeddings, ((0, 0), (0, Np - N), (0, 0)))
    mask_f = jnp.pad((~action_mask).astype(jnp.float32), ((0, 0), (0, Np - N)),
                     constant_values=1.0)

    # --- Pallas: precompute cache (one fused node-projection tensor + graph context) ---
    cache, graph_ctx = precompute_cache(emb_pad, w_node, w_fixed, n_real=N)

    # --- Pallas: one decoding step (log probabilities over nodes) ---
    log_p_pad = get_log_p(cache, graph_ctx, emb_pad, first_node, current_node,
                          mask_f, w_context, w_out)
    log_p = log_p_pad[:, :N]
    action = jnp.argmax(log_p, axis=-1)                       # greedy decode

    log_p = jax.block_until_ready(log_p)
    action = jax.block_until_ready(action)

    # correctness check vs pure-JAX reference
    emb_first = jnp.take_along_axis(embeddings, first_node[:, None, None], axis=1)[:, 0, :]
    emb_curr = jnp.take_along_axis(embeddings, current_node[:, None, None], axis=1)[:, 0, :]
    ctx2d = jnp.concatenate([emb_first, emb_curr], axis=-1)
    ref = _reference(embeddings, ctx2d, action_mask, w_node, w_fixed, w_context, w_out)
    valid = action_mask
    assert jnp.allclose(jnp.where(valid, log_p, 0.0),
                        jnp.where(valid, ref, 0.0), atol=1e-4, rtol=1e-4), "mismatch vs reference"
    assert bool(jnp.all(jnp.isneginf(jnp.where(~valid, log_p, -jnp.inf)))), "mask not applied"
    assert bool(jnp.all(jnp.isneginf(log_p_pad[:, N:]))), "padding lanes not masked"

    print("KERNEL_OK")
</pallas_src>

<mosaic_0001>
module attributes {stable_mosaic.version = 11 : i64} {
  func.func @_node_proj_kernel(%arg0: i32, %arg1: memref<256x32xf32, #tpu.memory_space<vmem>>, %arg2: memref<32x96xf32, #tpu.memory_space<vmem>>, %arg3: memref<256x96xf32, #tpu.memory_space<vmem>>) attributes {dimension_semantics = [#tpu.dimension_semantics<parallel>], iteration_bounds = array<i64: 1>, scalar_prefetch = 0 : i64, scratch_operands = 0 : i64, tpu.core_type = #tpu.core_type<tc>, window_params = [{transform_indices = @transform_0, window_bounds = array<i64: 256, 32>}, {pipeline_mode = #tpu.pipeline_mode<synchronous>, transform_indices = @transform_1, window_bounds = array<i64: 32, 96>}, {transform_indices = @transform_2, window_bounds = array<i64: 256, 96>}]} {
    %c0 = arith.constant 0 : index
    %c0_0 = arith.constant 0 : index
    %0 = vector.load %arg1[%c0, %c0_0] : memref<256x32xf32, #tpu.memory_space<vmem>>, vector<256x32xf32>
    %c0_1 = arith.constant 0 : index
    %c0_2 = arith.constant 0 : index
    %1 = vector.load %arg2[%c0_1, %c0_2] : memref<32x96xf32, #tpu.memory_space<vmem>>, vector<32x96xf32>
    %cst = arith.constant dense<0.000000e+00> : vector<256x96xf32>
    %2 = tpu.matmul %0, %1, %cst {dimension_numbers = #tpu.dot_dimension_numbers<[1], [0], [0], [1], [0, 0, 1, 1], [], []>} : vector<256x32xf32>, vector<32x96xf32>, vector<256x96xf32> -> vector<256x96xf32>
    %c0_3 = arith.constant 0 : index
    %c0_4 = arith.constant 0 : index
    %3 = vector.load %arg3[%c0_3, %c0_4] : memref<256x96xf32, #tpu.memory_space<vmem>>, vector<256x96xf32>
    tpu.vector_store %arg3[%c0_3, %c0_4], %2 {strides = array<i32>} : memref<256x96xf32, #tpu.memory_space<vmem>>, vector<256x96xf32>,
    return
  }
  func.func @transform_0(%arg0: i32) -> (i32, i32) {
    %c0_i32 = arith.constant 0 : i32
    %c0_i32_0 = arith.constant 0 : i32
    return %arg0, %c0_i32 : i32, i32
  }
  func.func @transform_1(%arg0: i32) -> (i32, i32) {
    %c0_i32 = arith.constant 0 : i32
    %c0_i32_0 = arith.constant 0 : i32
    %c0_i32_1 = arith.constant 0 : i32
    return %c0_i32, %c0_i32_0 : i32, i32
  }
  func.func @transform_2(%arg0: i32) -> (i32, i32) {
    %c0_i32 = arith.constant 0 : i32
    %c0_i32_0 = arith.constant 0 : i32
    return %arg0, %c0_i32 : i32, i32
  }
}

</mosaic_0001>

<llo_original>
// kernel: tpu_custom_call.1
$region0: #{tpu_custom_call.1}
  #allocation0 [shape = 'u32[]', space=smem, size = 0x4, offset = 0x4, fixed_abs, tag = 'smem constant byte address 0x4 - core index']
  #allocation1 [shape = 'u32[144,128]{1,0:T(1,128)}', space=vmem, size = 0x12000, scoped, tag = 'internal scratch']
  %s0 = inlined_call_operand.vmem [shape: f32[256,32], index: 0, kind: input, shape index: {}]
  %s1 = inlined_call_operand.vmem [shape: f32[32,96], index: 1, kind: input, shape index: {}]
  %s2 = inlined_call_operand.vmem [shape: f32[256,96], index: 2, kind: output, shape index: {}]
  %s3 = sld [smem:[#allocation0]]
  $region18: #{tpu_custom_call.1} parent=0
    _
  %s5 = ssub.s32 1, %s3
  %s6 = scalar_select 0, %s5, %s3
  // Predicated region
  $region2: #{tpu_custom_call.1} parent=0 // pred_check
    _
  $region3: #{tpu_custom_call.1} parent=0 // pred_check_branch
    %8 = sbr.rel (0) target = $region5
  $region4: #{tpu_custom_call.1} parent=0 // pred_region
    _
  $region5: #{tpu_custom_call.1} parent=0 // pred_fallthru
    _
  // Predicated region
  $region6: #{tpu_custom_call.1} parent=0 // pred_check
    _
  $region7: #{tpu_custom_call.1} parent=0 // pred_check_branch
    %10 = sbr.rel (0) target = $region9
  $region8: #{tpu_custom_call.1} parent=0 // pred_region
    _
  $region9: #{tpu_custom_call.1} parent=0 // pred_fallthru
    _
  %v11 = vld [vmem:[%s0] sm:$0xff]
  %v12 = vld [vmem:[%s0 + $0x8] sm:$0xff]
  %v13 = vld [vmem:[%s0 + $0x10] sm:$0xff]
  %v14 = vld [vmem:[%s0 + $0x18] sm:$0xff]
  %v15 = vld [vmem:[%s0 + $0x20] sm:$0xff]
  %v16 = vld [vmem:[%s0 + $0x28] sm:$0xff]
  %v17 = vld [vmem:[%s0 + $0x30] sm:$0xff]
  %v18 = vld [vmem:[%s0 + $0x38] sm:$0xff]
  %v19 = vld [vmem:[%s0 + $0x40] sm:$0xff]
  %v20 = vld [vmem:[%s0 + $0x48] sm:$0xff]
  %v21 = vld [vmem:[%s0 + $0x50] sm:$0xff]
  %v22 = vld [vmem:[%s0 + $0x58] sm:$0xff]
  %v23 = vld [vmem:[%s0 + $0x60] sm:$0xff]
  %v24 = vld [vmem:[%s0 + $0x68] sm:$0xff]
  %v25 = vld [vmem:[%s0 + $0x70] sm:$0xff]
  %v26 = vld [vmem:[%s0 + $0x78] sm:$0xff]
  %v27 = vld [vmem:[%s0 + $0x80] sm:$0xff]
  %v28 = vld [vmem:[%s0 + $0x88] sm:$0xff]
  %v29 = vld [vmem:[%s0 + $0x90] sm:$0xff]
  %v30 = vld [vmem:[%s0 + $0x98] sm:$0xff]
  %v31 = vld [vmem:[%s0 + $0xa0] sm:$0xff]
  %v32 = vld [vmem:[%s0 + $0xa8] sm:$0xff]
  %v33 = vld [vmem:[%s0 + $0xb0] sm:$0xff]
  %v34 = vld [vmem:[%s0 + $0xb8] sm:$0xff]
  %v35 = vld [vmem:[%s0 + $0xc0] sm:$0xff]
  %v36 = vld [vmem:[%s0 + $0xc8] sm:$0xff]
  %v37 = vld [vmem:[%s0 + $0xd0] sm:$0xff]
  %v38 = vld [vmem:[%s0 + $0xd8] sm:$0xff]
  %v39 = vld [vmem:[%s0 + $0xe0] sm:$0xff]
  %v40 = vld [vmem:[%s0 + $0xe8] sm:$0xff]
  %v41 = vld [vmem:[%s0 + $0xf0] sm:$0xff]
  %v42 = vld [vmem:[%s0 + $0xf8] sm:$0xff]
  %v43 = vld [vmem:[%s1] sm:$0xff]
  %v44 = vld [vmem:[%s1 + $0x8] sm:$0xff]
  %v45 = vld [vmem:[%s1 + $0x10] sm:$0xff]
  %v46 = vld [vmem:[%s1 + $0x18] sm:$0xff]
  %vm47 = vcmask 261120
  %v49 = vsel %vm47, %v11, 0
  %v52 = vsel %vm47, %v12, 0
  %v55 = vsel %vm47, %v13, 0
  %v58 = vsel %vm47, %v14, 0
  %v61 = vsel %vm47, %v15, 0
  %v64 = vsel %vm47, %v16, 0
  %v67 = vsel %vm47, %v17, 0
  %v70 = vsel %vm47, %v18, 0
  %v73 = vsel %vm47, %v19, 0
  %v76 = vsel %vm47, %v20, 0
  %v79 = vsel %vm47, %v21, 0
  %v82 = vsel %vm47, %v22, 0
  %v85 = vsel %vm47, %v23, 0
  %v88 = vsel %vm47, %v24, 0
  %v91 = vsel %vm47, %v25, 0
  %v94 = vsel %vm47, %v26, 0
  %v97 = vsel %vm47, %v27, 0
  %v100 = vsel %vm47, %v28, 0
  %v103 = vsel %vm47, %v29, 0
  %v106 = vsel %vm47, %v30, 0
  %v109 = vsel %vm47, %v31, 0
  %v112 = vsel %vm47, %v32, 0
  %v115 = vsel %vm47, %v33, 0
  %v118 = vsel %vm47, %v34, 0
  %v121 = vsel %vm47, %v35, 0
  %v124 = vsel %vm47, %v36, 0
  %v127 = vsel %vm47, %v37, 0
  %v130 = vsel %vm47, %v38, 0
  %v133 = vsel %vm47, %v39, 0
  %v136 = vsel %vm47, %v40, 0
  %v139 = vsel %vm47, %v41, 0
  %v142 = vsel %vm47, %v42, 0
  %144 = vmatprep.subr.mxu0 0.0
  %145 = vmatpush1.msra.mxu0 %v43
  %146 = vmatprep.subr.mxu0 0.0
  %147 = vmatpush1.msra.mxu0 %v44
  %148 = vmatprep.subr.mxu0 0.0
  %149 = vmatpush1.msra.mxu0 %v45
  %150 = vmatprep.subr.mxu0 0.0
  %151 = vmatpush1.msra.mxu0 %v46
  %152 = vmatprep.subr.mxu0 0.0
  %153 = vmatpush1.msra.mxu0 0.0
  %154 = vmatprep.subr.mxu0 0.0
  %155 = vmatpush1.msra.mxu0 0.0
  %156 = vmatprep.subr.mxu0 0.0
  %157 = vmatpush1.msra.mxu0 0.0
  %158 = vmatprep.subr.mxu0 0.0
  %159 = vmatpush1.msra.mxu0 0.0
  %160 = vmatprep.subr.mxu0 0.0
  %161 = vmatpush1.msra.mxu0 0.0
  %162 = vmatprep.subr.mxu0 0.0
  %163 = vmatpush1.msra.mxu0 0.0
  %164 = vmatprep.subr.mxu0 0.0
  %165 = vmatpush1.msra.mxu0 0.0
  %166 = vmatprep.subr.mxu0 0.0
  %167 = vmatpush1.msra.mxu0 0.0
  %168 = vmatprep.subr.mxu0 0.0
  %169 = vmatpush1.msra.mxu0 0.0
  %170 = vmatprep.subr.mxu0 0.0
  %171 = vmatpush1.msra.mxu0 0.0
  %172 = vmatprep.subr.mxu0 0.0
  %173 = vmatpush1.msra.mxu0 0.0
  %174 = vmatprep.subr.mxu0 0.0
  %175 = vmatpush1.msra.mxu0 0.0
  %176 = vmatprep.subr.mxu0 0.0
  %177 = vmatpush1.msra.mxu0 0.0
  %178 = vmatprep.subr.mxu0 0.0
  %179 = vmatpush1.msra.mxu0 0.0
  %180 = vmatprep.subr.mxu0 0.0
  %181 = vmatpush1.msra.mxu0 0.0
  %182 = vmatprep.subr.mxu0 0.0
  %183 = vmatpush1.msra.mxu0 0.0
  %184 = vmatprep.subr.mxu0 0.0
  %185 = vmatpush1.msra.mxu0 0.0
  %186 = vmatprep.subr.mxu0 0.0
  %187 = vmatpush1.msra.mxu0 0.0
  %188 = vmatprep.subr.mxu0 0.0
  %189 = vmatpush1.msra.mxu0 0.0
  %190 = vmatprep.subr.mxu0 0.0
  %191 = vmatpush1.msra.mxu0 0.0
  %192 = vmatprep.subr.mxu0 0.0
  %193 = vmatpush1.msra.mxu0 0.0
  %194 = vmatprep.subr.mxu0 0.0
  %195 = vmatpush1.msra.mxu0 0.0
  %196 = vmatprep.subr.mxu0 0.0
  %197 = vmatpush1.msra.mxu0 0.0
  %198 = vmatprep.subr.mxu0 0.0
  %199 = vmatpush1.msra.mxu0 0.0
  %200 = vmatprep.subr.mxu0 0.0
  %201 = vmatpush1.msra.mxu0 0.0
  %202 = vmatprep.subr.mxu0 0.0
  %203 = vmatpush1.msra.mxu0 0.0
  %204 = vmatprep.subr.mxu0 0.0
  %205 = vmatpush1.msra.mxu0 0.0
  %206 = vmatprep.subr.mxu0 0.0
  %207 = vmatpush1.msra.mxu0 0.0
  %208 = vmatprep.mubr.f32.mxu0 0.0
  %209 = vmatmul.mubr.f32.gmra.mrb[0].mxu0 %v49
  %v210 = vpop.f32.mrb[0].mxu0
  %v211 = vadd.f32 0.0, %v210
  %v212 = vpop.f32.mrb[0].mxu0
  %213 = vmatprep.mubr.f32.mxu0 0.0
  %214 = vmatmul.mubr.f32.gmra.mrb[0].mxu0 %v52
  %v215 = vpop.f32.mrb[0].mxu0
  %v216 = vadd.f32 0.0, %v215
  %v217 = vpop.f32.mrb[0].mxu0
  %218 = vmatprep.mubr.f32.mxu0 0.0
  %219 = vmatmul.mubr.f32.gmra.mrb[0].mxu0 %v55
  %v220 = vpop.f32.mrb[0].mxu0
  %v221 = vadd.f32 0.0, %v220
  %v222 = vpop.f32.mrb[0].mxu0
  %223 = vmatprep.mubr.f32.mxu0 0.0
  %224 = vmatmul.mubr.f32.gmra.mrb[0].mxu0 %v58
  %v225 = vpop.f32.mrb[0].mxu0
  %v226 = vadd.f32 0.0, %v225
  %v227 = vpop.f32.mrb[0].mxu0
  %228 = vmatprep.mubr.f32.mxu0 0.0
  %229 = vmatmul.mubr.f32.gmra.mrb[0].mxu0 %v61
  %v230 = vpop.f32.mrb[0].mxu0
  %v231 = vadd.f32 0.0, %v230
  %v232 = vpop.f32.mrb[0].mxu0
  %233 = vmatprep.mubr.f32.mxu0 0.0
  %234 = vmatmul.mubr.f32.gmra.mrb[0].mxu0 %v64
  %v235 = vpop.f32.mrb[0].mxu0
  %v236 = vadd.f32 0.0, %v235
  %v237 = vpop.f32.mrb[0].mxu0
  %238 = vmatprep.mubr.f32.mxu0 0.0
  %239 = vmatmul.mubr.f32.gmra.mrb[0].mxu0 %v67
  %v240 = vpop.f32.mrb[0].mxu0
  %v241 = vadd.f32 0.0, %v240
  %v242 = vpop.f32.mrb[0].mxu0
  %243 = vmatprep.mubr.f32.mxu0 0.0
  %244 = vmatmul.mubr.f32.gmra.mrb[0].mxu0 %v70
  %v245 = vpop.f32.mrb[0].mxu0
  %v246 = vadd.f32 0.0, %v245
  %v247 = vpop.f32.mrb[0].mxu0
  %248 = vmatprep.mubr.f32.mxu0 0.0
  %249 = vmatmul.mubr.f32.gmra.mrb[0].mxu0 %v73
  %v250 = vpop.f32.mrb[0].mxu0
  %v251 = vadd.f32 0.0, %v250
  %v252 = vpop.f32.mrb[0].mxu0
  %253 = vmatprep.mubr.f32.mxu0 0.0
  %254 = vmatmul.mubr.f32.gmra.mrb[0].mxu0 %v76
  %v255 = vpop.f32.mrb[0].mxu0
  %v256 = vadd.f32 0.0, %v255
  %v257 = vpop.f32.mrb[0].mxu0
  %258 = vmatprep.mubr.f32.mxu0 0.0
  %259 = vmatmul.mubr.f32.gmra.mrb[0].mxu0 %v79
  %v260 = vpop.f32.mrb[0].mxu0
  %v261 = vadd.f32 0.0, %v260
  %v262 = vpop.f32.mrb[0].mxu0
  %263 = vmatprep.mubr.f32.mxu0 0.0
  %264 = vmatmul.mubr.f32.gmra.mrb[0].mxu0 %v82
  %v265 = vpop.f32.mrb[0].mxu0
  %v266 = vadd.f32 0.0, %v265
  %v267 = vpop.f32.mrb[0].mxu0
  %268 = vmatprep.mubr.f32.mxu0 0.0
  %269 = vmatmul.mubr.f32.gmra.mrb[0].mxu0 %v85
  %v270 = vpop.f32.mrb[0].mxu0
  %v271 = vadd.f32 0.0, %v270
  %v272 = vpop.f32.mrb[0].mxu0
  %273 = vmatprep.mubr.f32.mxu0 0.0
  %274 = vmatmul.mubr.f32.gmra.mrb[0].mxu0 %v88
  %v275 = vpop.f32.mrb[0].mxu0
  %v276 = vadd.f32 0.0, %v275
  %v277 = vpop.f32.mrb[0].mxu0
  %278 = vmatprep.mubr.f32.mxu0 0.0
  %279 = vmatmul.mubr.f32.gmra.mrb[0].mxu0 %v91
  %v280 = vpop.f32.mrb[0].mxu0
  %v281 = vadd.f32 0.0, %v280
  %v282 = vpop.f32.mrb[0].mxu0
  %283 = vmatprep.mubr.f32.mxu0 0.0
  %284 = vmatmul.mubr.f32.gmra.mrb[0].mxu0 %v94
  %v285 = vpop.f32.mrb[0].mxu0
  %v286 = vadd.f32 0.0, %v285
  %v287 = vpop.f32.mrb[0].mxu0
  %288 = vmatprep.mubr.f32.mxu0 0.0
  %289 = vmatmul.mubr.f32.gmra.mrb[0].mxu0 %v97
  %v290 = vpop.f32.mrb[0].mxu0
  %v291 = vadd.f32 0.0, %v290
  %v292 = vpop.f32.mrb[0].mxu0
  %293 = vmatprep.mubr.f32.mxu0 0.0
  %294 = vmatmul.mubr.f32.gmra.mrb[0].mxu0 %v100
  %v295 = vpop.f32.mrb[0].mxu0
  %v296 = vadd.f32 0.0, %v295
  %v297 = vpop.f32.mrb[0].mxu0
  %298 = vmatprep.mubr.f32.mxu0 0.0
  %299 = vmatmul.mubr.f32.gmra.mrb[0].mxu0 %v103
  %v300 = vpop.f32.mrb[0].mxu0
  %v301 = vadd.f32 0.0, %v300
  %v302 = vpop.f32.mrb[0].mxu0
  %303 = vmatprep.mubr.f32.mxu0 0.0
  %304 = vmatmul.mubr.f32.gmra.mrb[0].mxu0 %v106
  %v305 = vpop.f32.mrb[0].mxu0
  %v306 = vadd.f32 0.0, %v305
  %v307 = vpop.f32.mrb[0].mxu0
  %308 = vmatprep.mubr.f32.mxu0 0.0
  %309 = vmatmul.mubr.f32.gmra.mrb[0].mxu0 %v109
  %v310 = vpop.f32.mrb[0].mxu0
  %v311 = vadd.f32 0.0, %v310
  %v312 = vpop.f32.mrb[0].mxu0
  %313 = vmatprep.mubr.f32.mxu0 0.0
  %314 = vmatmul.mubr.f32.gmra.mrb[0].mxu0 %v112
  %v315 = vpop.f32.mrb[0].mxu0
  %v316 = vadd.f32 0.0, %v315
  %v317 = vpop.f32.mrb[0].mxu0
  %318 = vmatprep.mubr.f32.mxu0 0.0
  %319 = vmatmul.mubr.f32.gmra.mrb[0].mxu0 %v115
  %v320 = vpop.f32.mrb[0].mxu0
  %v321 = vadd.f32 0.0, %v320
  %v322 = vpop.f32.mrb[0].mxu0
  %323 = vmatprep.mubr.f32.mxu0 0.0
  %324 = vmatmul.mubr.f32.gmra.mrb[0].mxu0 %v118
  %v325 = vpop.f32.mrb[0].mxu0
  %v326 = vadd.f32 0.0, %v325
  %v327 = vpop.f32.mrb[0].mxu0
  %328 = vmatprep.mubr.f32.mxu0 0.0
  %329 = vmatmul.mubr.f32.gmra.mrb[0].mxu0 %v121
  %v330 = vpop.f32.mrb[0].mxu0
  %v331 = vadd.f32 0.0, %v330
  %v332 = vpop.f32.mrb[0].mxu0
  %333 = vmatprep.mubr.f32.mxu0 0.0
  %334 = vmatmul.mubr.f32.gmra.mrb[0].mxu0 %v124
  %v335 = vpop.f32.mrb[0].mxu0
  %v336 = vadd.f32 0.0, %v335
  %v337 = vpop.f32.mrb[0].mxu0
  %338 = vmatprep.mubr.f32.mxu0 0.0
  %339 = vmatmul.mubr.f32.gmra.mrb[0].mxu0 %v127
  %v340 = vpop.f32.mrb[0].mxu0
  %v341 = vadd.f32 0.0, %v340
  %v342 = vpop.f32.mrb[0].mxu0
  %343 = vmatprep.mubr.f32.mxu0 0.0
  %344 = vmatmul.mubr.f32.gmra.mrb[0].mxu0 %v130
  %v345 = vpop.f32.mrb[0].mxu0
  %v346 = vadd.f32 0.0, %v345
  %v347 = vpop.f32.mrb[0].mxu0
  %348 = vmatprep.mubr.f32.mxu0 0.0
  %349 = vmatmul.mubr.f32.gmra.mrb[0].mxu0 %v133
  %v350 = vpop.f32.mrb[0].mxu0
  %v351 = vadd.f32 0.0, %v350
  %v352 = vpop.f32.mrb[0].mxu0
  %353 = vmatprep.mubr.f32.mxu0 0.0
  %354 = vmatmul.mubr.f32.gmra.mrb[0].mxu0 %v136
  %v355 = vpop.f32.mrb[0].mxu0
  %v356 = vadd.f32 0.0, %v355
  %v357 = vpop.f32.mrb[0].mxu0
  %358 = vmatprep.mubr.f32.mxu0 0.0
  %359 = vmatmul.mubr.f32.gmra.mrb[0].mxu0 %v139
  %v360 = vpop.f32.mrb[0].mxu0
  %v361 = vadd.f32 0.0, %v360
  %v362 = vpop.f32.mrb[0].mxu0
  %363 = vmatprep.mubr.f32.mxu0 0.0
  %364 = vmatmul.mubr.f32.gmra.mrb[0].mxu0 %v142
  %v365 = vpop.f32.mrb[0].mxu0
  %v366 = vadd.f32 0.0, %v365
  %v367 = vpop.f32.mrb[0].mxu0
  %368 = vdwg.mxu0
  %vm369 = vcmask 785408
  %370 = vst.msk [vmem:[%s2] sm:$0xff] %vm369, %v211
  %371 = vst.msk [vmem:[%s2 + $0x8] sm:$0xff] %vm369, %v216
  %372 = vst.msk [vmem:[%s2 + $0x10] sm:$0xff] %vm369, %v221
  %373 = vst.msk [vmem:[%s2 + $0x18] sm:$0xff] %vm369, %v226
  %374 = vst.msk [vmem:[%s2 + $0x20] sm:$0xff] %vm369, %v231
  %375 = vst.msk [vmem:[%s2 + $0x28] sm:$0xff] %vm369, %v236
  %376 = vst.msk [vmem:[%s2 + $0x30] sm:$0xff] %vm369, %v241
  %377 = vst.msk [vmem:[%s2 + $0x38] sm:$0xff] %vm369, %v246
  %378 = vst.msk [vmem:[%s2 + $0x40] sm:$0xff] %vm369, %v251
  %379 = vst.msk [vmem:[%s2 + $0x48] sm:$0xff] %vm369, %v256
  %380 = vst.msk [vmem:[%s2 + $0x50] sm:$0xff] %vm369, %v261
  %381 = vst.msk [vmem:[%s2 + $0x58] sm:$0xff] %vm369, %v266
  %382 = vst.msk [vmem:[%s2 + $0x60] sm:$0xff] %vm369, %v271
  %383 = vst.msk [vmem:[%s2 + $0x68] sm:$0xff] %vm369, %v276
  %384 = vst.msk [vmem:[%s2 + $0x70] sm:$0xff] %vm369, %v281
  %385 = vst.msk [vmem:[%s2 + $0x78] sm:$0xff] %vm369, %v286
  %386 = vst.msk [vmem:[%s2 + $0x80] sm:$0xff] %vm369, %v291
  %387 = vst.msk [vmem:[%s2 + $0x88] sm:$0xff] %vm369, %v296
  %388 = vst.msk [vmem:[%s2 + $0x90] sm:$0xff] %vm369, %v301
  %389 = vst.msk [vmem:[%s2 + $0x98] sm:$0xff] %vm369, %v306
  %390 = vst.msk [vmem:[%s2 + $0xa0] sm:$0xff] %vm369, %v311
  %391 = vst.msk [vmem:[%s2 + $0xa8] sm:$0xff] %vm369, %v316
  %392 = vst.msk [vmem:[%s2 + $0xb0] sm:$0xff] %vm369, %v321
  %393 = vst.msk [vmem:[%s2 + $0xb8] sm:$0xff] %vm369, %v326
  %394 = vst.msk [vmem:[%s2 + $0xc0] sm:$0xff] %vm369, %v331
  %395 = vst.msk [vmem:[%s2 + $0xc8] sm:$0xff] %vm369, %v336
  %396 = vst.msk [vmem:[%s2 + $0xd0] sm:$0xff] %vm369, %v341
  %397 = vst.msk [vmem:[%s2 + $0xd8] sm:$0xff] %vm369, %v346
  %398 = vst.msk [vmem:[%s2 + $0xe0] sm:$0xff] %vm369, %v351
  %399 = vst.msk [vmem:[%s2 + $0xe8] sm:$0xff] %vm369, %v356
  %400 = vst.msk [vmem:[%s2 + $0xf0] sm:$0xff] %vm369, %v361
  %401 = vst.msk [vmem:[%s2 + $0xf8] sm:$0xff] %vm369, %v366
  // Predicated region
  $region10: #{tpu_custom_call.1} parent=0 // pred_check
    _
  $region11: #{tpu_custom_call.1} parent=0 // pred_check_branch
    %403 = sbr.rel (0) target = $region13
  $region12: #{tpu_custom_call.1} parent=0 // pred_region
    _
  $region13: #{tpu_custom_call.1} parent=0 // pred_fallthru
    _
  // Predicated region
  $region14: #{tpu_custom_call.1} parent=0 // pred_check
    _
  $region15: #{tpu_custom_call.1} parent=0 // pred_check_branch
    %405 = sbr.rel (0) target = $region17
  $region16: #{tpu_custom_call.1} parent=0 // pred_region
    _
  $region17: #{tpu_custom_call.1} parent=0 // pred_fallthru
    _

</llo_original>
